<compile_context>
chip_gen: v7x
topology: tpu7x:2x2x1
jax: 0.10.0
libtpu: 0.0.40
codegen_flags: <defaults>
</compile_context>

<pallas_src>
import functools

import jax
import jax.numpy as jnp
from jax.experimental import pallas as pl
from jax.experimental.pallas import tpu as pltpu


# ----------------------------------------------------------------------------
# Pallas kernel: quaternion rotation scores
# ----------------------------------------------------------------------------
def _dense_score_kernel(hx_ref, hy_ref, hz_ref,
                        tx_ref, ty_ref, tz_ref,
                        rw_ref, rx_ref, rz_ref,
                        out_ref, *, gamma, half_inv_d):
    hx = hx_ref[...]
    hy = hy_ref[...]
    hz = hz_ref[...]
    tx = tx_ref[...]
    ty = ty_ref[...]
    tz = tz_ref[...]
    rw = rw_ref[...]
    rx = rx_ref[...]
    rz = rz_ref[...]
    # Reproduces the original getEmbeddings() returning t_y in the rel_y slot.
    ry = ty

    # Quaternion normalization via rsqrt (EUP slot; avoids sqrt + divide).
    inv = jax.lax.rsqrt(rw * rw + rx * rx + ry * ry + rz * rz)
    w = rw * inv
    x = rx * inv
    y = ry * inv
    z = rz * inv

    # Rotation matrix computed once; the inverse rotation is its transpose
    # (identical values to the reference's x,y,z -> -x,-y,-z recomputation).
    xx = x * x
    yy = y * y
    zz = z * z
    xy = x * y
    xz = x * z
    yz = y * z
    xw = x * w
    yw = y * w
    zw = z * w

    r00 = 1.0 - 2.0 * yy - 2.0 * zz
    r01 = 2.0 * xy - 2.0 * zw
    r02 = 2.0 * xz + 2.0 * yw
    r10 = 2.0 * xy + 2.0 * zw
    r11 = 1.0 - 2.0 * xx - 2.0 * zz
    r12 = 2.0 * yz - 2.0 * xw
    r20 = 2.0 * xz - 2.0 * yw
    r21 = 2.0 * yz + 2.0 * xw
    r22 = 1.0 - 2.0 * xx - 2.0 * yy

    # Rotate head by quaternion, compare with tail.
    dx = r00 * hx + r01 * hy + r02 * hz - tx
    dy = r10 * hx + r11 * hy + r12 * hz - ty
    dz = r20 * hx + r21 * hy + r22 * hz - tz
    s1 = jnp.sqrt(dx * dx + dy * dy + dz * dz)               # [TB, D]

    # Inverse rotation (transpose) applied to tail, compare with head.
    ex = r00 * tx + r10 * ty + r20 * tz - hx
    ey = r01 * tx + r11 * ty + r21 * tz - hy
    ez = r02 * tx + r12 * ty + r22 * tz - hz
    s2 = jnp.sqrt(ex * ex + ey * ey + ez * ez)               # [TB, D]

    # 0.5 * (mean(s1) + mean(s2)) == sum(s1 + s2) * 0.5 / D
    s = jnp.sum(s1 + s2, axis=1, keepdims=True) * half_inv_d  # [TB, 1]
    out_ref[...] = gamma - s


def _pick_tile(batch_pad8, d):
    """Largest multiple-of-8 batch tile whose double-buffered inputs fit ~18 MiB
    (safe on v7x's 64 MiB VMEM as well as v5e/v6e)."""
    budget = 18 * 1024 * 1024
    tb = budget // (9 * 2 * 4 * d)          # 9 inputs x 2 buffers x f32
    tb = max(8, (tb // 8) * 8)
    tb = min(tb, 1024)
    tb = min(tb, batch_pad8)
    return int(tb)


def dense_score_pallas(h_x, h_y, h_z, t_x, t_y, t_z, r_w, r_x, r_z,
                       gamma=12.0):
    """Runs the DE_DensE quaternion scoring hot-path as a batch-tiled Pallas
    pipeline.  All inputs are [B, D] float32; output is [B] float32."""
    B, D = h_x.shape
    b_pad8 = ((B + 7) // 8) * 8
    tb = _pick_tile(b_pad8, D)
    b_pad = ((B + tb - 1) // tb) * tb
    pad = b_pad - B

    def pad_rows(a, value=0.0):
        if pad == 0:
            return a
        return jnp.pad(a, ((0, pad), (0, 0)), constant_values=value)

    # rw padded with 1.0 so padded rows normalize cleanly (no inf/NaN);
    # padded output rows are sliced off below.
    inputs = [pad_rows(h_x), pad_rows(h_y), pad_rows(h_z),
              pad_rows(t_x), pad_rows(t_y), pad_rows(t_z),
              pad_rows(r_w, 1.0), pad_rows(r_x), pad_rows(r_z)]

    kernel = functools.partial(_dense_score_kernel,
                               gamma=float(gamma),
                               half_inv_d=0.5 / float(D))

    in_spec = pl.BlockSpec((tb, D), lambda i: (i, 0))
    out_spec = pl.BlockSpec((tb, 1), lambda i: (i, 0))

    out = pl.pallas_call(
        kernel,
        out_shape=jax.ShapeDtypeStruct((b_pad, 1), jnp.float32),
        grid_spec=pltpu.PrefetchScalarGridSpec(
            num_scalar_prefetch=0,
            grid=(b_pad // tb,),
            in_specs=[in_spec] * 9,
            out_specs=out_spec,
        ),
        compiler_params=pltpu.CompilerParams(
            dimension_semantics=("parallel",),   # megacore sharding on v7x
            vmem_limit_bytes=40 << 20),
    )(*inputs)
    return out[:B, 0]


# ----------------------------------------------------------------------------
# Plain-JAX glue: parameters, embedding gathers, diachronic time embeddings
# ----------------------------------------------------------------------------
def xavier_uniform(key, shape):
    fan_in, fan_out = shape[1], shape[0]
    bound = jnp.sqrt(6.0 / (fan_in + fan_out))
    return jax.random.uniform(key, shape, jnp.float32, -bound, bound)


def make_params(key, num_ent, num_rel, s_dim, t_dim):
    names_ent = ["ent_x", "ent_y", "ent_z",
                 "y_freq", "m_freq", "d_freq",
                 "y_phi", "m_phi", "d_phi",
                 "y_amp", "m_amp", "d_amp"]
    names_rel = ["rel_w", "rel_x", "rel_y", "rel_z"]
    keys = jax.random.split(key, len(names_ent) + len(names_rel))
    params = {}
    i = 0
    for n in names_ent:
        dim = s_dim if n.startswith("ent") else t_dim
        params[n] = xavier_uniform(keys[i], (num_ent, dim))
        i += 1
    for n in names_rel:
        params[n] = xavier_uniform(keys[i], (num_rel, s_dim + t_dim))
        i += 1
    return params


def get_time_embedd(params, ents, year, month, day):
    # year/month/day: [B, 1]
    y = params["y_amp"][ents] * jnp.sin(params["y_freq"][ents] * year + params["y_phi"][ents])
    m = params["m_amp"][ents] * jnp.sin(params["m_freq"][ents] * month + params["m_phi"][ents])
    d = params["d_amp"][ents] * jnp.sin(params["d_freq"][ents] * day + params["d_phi"][ents])
    return y + m + d                                         # [B, t_dim]


def de_dense_forward(params, heads, rels, tails, years, months, days,
                     gamma=12.0):
    years = years.reshape(-1, 1).astype(jnp.float32)
    months = months.reshape(-1, 1).astype(jnp.float32)
    days = days.reshape(-1, 1).astype(jnp.float32)

    h_time = get_time_embedd(params, heads, years, months, days)
    t_time = get_time_embedd(params, tails, years, months, days)

    h_x = jnp.concatenate([params["ent_x"][heads], h_time], axis=1)
    h_y = jnp.concatenate([params["ent_y"][heads], h_time], axis=1)
    h_z = jnp.concatenate([params["ent_z"][heads], h_time], axis=1)
    t_x = jnp.concatenate([params["ent_x"][tails], t_time], axis=1)
    t_y = jnp.concatenate([params["ent_y"][tails], t_time], axis=1)
    t_z = jnp.concatenate([params["ent_z"][tails], t_time], axis=1)

    r_w = params["rel_w"][rels]
    r_x = params["rel_x"][rels]
    r_z = params["rel_z"][rels]
    # r_y from the PyTorch code is silently replaced by t_y inside
    # getEmbeddings(); the kernel handles that substitution internally.

    return dense_score_pallas(h_x, h_y, h_z, t_x, t_y, t_z,
                              r_w, r_x, r_z, gamma=gamma)


# ----------------------------------------------------------------------------
# Pure-JAX reference (mirrors the PyTorch forward, including the r_y=t_y bug)
# ----------------------------------------------------------------------------
def de_dense_forward_ref(params, heads, rels, tails, years, months, days,
                         gamma=12.0):
    years = years.reshape(-1, 1).astype(jnp.float32)
    months = months.reshape(-1, 1).astype(jnp.float32)
    days = days.reshape(-1, 1).astype(jnp.float32)
    h_time = get_time_embedd(params, heads, years, months, days)
    t_time = get_time_embedd(params, tails, years, months, days)
    h_x = jnp.concatenate([params["ent_x"][heads], h_time], axis=1)
    h_y = jnp.concatenate([params["ent_y"][heads], h_time], axis=1)
    h_z = jnp.concatenate([params["ent_z"][heads], h_time], axis=1)
    t_x = jnp.concatenate([params["ent_x"][tails], t_time], axis=1)
    t_y = jnp.concatenate([params["ent_y"][tails], t_time], axis=1)
    t_z = jnp.concatenate([params["ent_z"][tails], t_time], axis=1)
    r_w = params["rel_w"][rels]
    r_x = params["rel_x"][rels]
    r_y = t_y                    # getEmbeddings quirk
    r_z = params["rel_z"][rels]

    denom = jnp.sqrt(r_w ** 2 + r_x ** 2 + r_y ** 2 + r_z ** 2)
    w, x, y, z = r_w / denom, r_x / denom, r_y / denom, r_z / denom

    ctx = (1 - 2 * y * y - 2 * z * z) * h_x + (2 * x * y - 2 * z * w) * h_y + (2 * x * z + 2 * y * w) * h_z
    cty = (2 * x * y + 2 * z * w) * h_x + (1 - 2 * x * x - 2 * z * z) * h_y + (2 * y * z - 2 * x * w) * h_z
    ctz = (2 * x * z - 2 * y * w) * h_x + (2 * y * z + 2 * x * w) * h_y + (1 - 2 * x * x - 2 * y * y) * h_z
    s1 = jnp.sqrt((ctx - t_x) ** 2 + (cty - t_y) ** 2 + (ctz - t_z) ** 2)

    x, y, z = -x, -y, -z
    chx = (1 - 2 * y * y - 2 * z * z) * t_x + (2 * x * y - 2 * z * w) * t_y + (2 * x * z + 2 * y * w) * t_z
    chy = (2 * x * y + 2 * z * w) * t_x + (1 - 2 * x * x - 2 * z * z) * t_y + (2 * y * z - 2 * x * w) * t_z
    chz = (2 * x * z - 2 * y * w) * t_x + (2 * y * z + 2 * x * w) * t_y + (1 - 2 * x * x - 2 * y * y) * t_z
    s2 = jnp.sqrt((chx - h_x) ** 2 + (chy - h_y) ** 2 + (chz - h_z) ** 2)

    score = (jnp.mean(s1, axis=1) + jnp.mean(s2, axis=1)) / 2.0
    return gamma - score


# ----------------------------------------------------------------------------
if __name__ == "__main__":
    NUM_ENT, NUM_REL = 10, 5
    S_DIM, T_DIM = 24, 8          # D = 32
    B = 8

    key = jax.random.PRNGKey(0)
    k_par, k_h, k_r, k_t, k_y, k_m, k_d = jax.random.split(key, 7)

    params = make_params(k_par, NUM_ENT, NUM_REL, S_DIM, T_DIM)

    heads = jax.random.randint(k_h, (B,), 0, NUM_ENT)
    rels = jax.random.randint(k_r, (B,), 0, NUM_REL)
    tails = jax.random.randint(k_t, (B,), 0, NUM_ENT)
    years = jax.random.uniform(k_y, (B,), jnp.float32, 0.0, 1.0)
    months = jax.random.uniform(k_m, (B,), jnp.float32, 0.0, 1.0)
    days = jax.random.uniform(k_d, (B,), jnp.float32, 0.0, 1.0)

    out = de_dense_forward(params, heads, rels, tails, years, months, days)
    out = jax.block_until_ready(out)

    ref = de_dense_forward_ref(params, heads, rels, tails, years, months, days)
    ref = jax.block_until_ready(ref)

    assert out.shape == (B,)
    assert jnp.allclose(out, ref, atol=1e-4, rtol=1e-4), (out, ref)

    print("KERNEL_OK")
</pallas_src>

<mosaic_0001>
module attributes {stable_mosaic.version = 11 : i64} {
  func.func @_dense_score_kernel(%arg0: i32, %arg1: memref<8x32xf32, #tpu.memory_space<vmem>>, %arg2: memref<8x32xf32, #tpu.memory_space<vmem>>, %arg3: memref<8x32xf32, #tpu.memory_space<vmem>>, %arg4: memref<8x32xf32, #tpu.memory_space<vmem>>, %arg5: memref<8x32xf32, #tpu.memory_space<vmem>>, %arg6: memref<8x32xf32, #tpu.memory_space<vmem>>, %arg7: memref<8x32xf32, #tpu.memory_space<vmem>>, %arg8: memref<8x32xf32, #tpu.memory_space<vmem>>, %arg9: memref<8x32xf32, #tpu.memory_space<vmem>>, %arg10: memref<8x1xf32, #tpu.memory_space<vmem>>) attributes {dimension_semantics = [#tpu.dimension_semantics<parallel>], iteration_bounds = array<i64: 1>, scalar_prefetch = 0 : i64, scratch_operands = 0 : i64, tpu.core_type = #tpu.core_type<tc>, window_params = [{transform_indices = @transform_0, window_bounds = array<i64: 8, 32>}, {transform_indices = @transform_1, window_bounds = array<i64: 8, 32>}, {transform_indices = @transform_2, window_bounds = array<i64: 8, 32>}, {transform_indices = @transform_3, window_bounds = array<i64: 8, 32>}, {transform_indices = @transform_4, window_bounds = array<i64: 8, 32>}, {transform_indices = @transform_5, window_bounds = array<i64: 8, 32>}, {transform_indices = @transform_6, window_bounds = array<i64: 8, 32>}, {transform_indices = @transform_7, window_bounds = array<i64: 8, 32>}, {transform_indices = @transform_8, window_bounds = array<i64: 8, 32>}, {transform_indices = @transform_9, window_bounds = array<i64: 8, 1>}]} {
    %c0 = arith.constant 0 : index
    %c0_0 = arith.constant 0 : index
    %0 = vector.load %arg1[%c0, %c0_0] : memref<8x32xf32, #tpu.memory_space<vmem>>, vector<8x32xf32>
    %c0_1 = arith.constant 0 : index
    %c0_2 = arith.constant 0 : index
    %1 = vector.load %arg2[%c0_1, %c0_2] : memref<8x32xf32, #tpu.memory_space<vmem>>, vector<8x32xf32>
    %c0_3 = arith.constant 0 : index
    %c0_4 = arith.constant 0 : index
    %2 = vector.load %arg3[%c0_3, %c0_4] : memref<8x32xf32, #tpu.memory_space<vmem>>, vector<8x32xf32>
    %c0_5 = arith.constant 0 : index
    %c0_6 = arith.constant 0 : index
    %3 = vector.load %arg4[%c0_5, %c0_6] : memref<8x32xf32, #tpu.memory_space<vmem>>, vector<8x32xf32>
    %c0_7 = arith.constant 0 : index
    %c0_8 = arith.constant 0 : index
    %4 = vector.load %arg5[%c0_7, %c0_8] : memref<8x32xf32, #tpu.memory_space<vmem>>, vector<8x32xf32>
    %c0_9 = arith.constant 0 : index
    %c0_10 = arith.constant 0 : index
    %5 = vector.load %arg6[%c0_9, %c0_10] : memref<8x32xf32, #tpu.memory_space<vmem>>, vector<8x32xf32>
    %c0_11 = arith.constant 0 : index
    %c0_12 = arith.constant 0 : index
    %6 = vector.load %arg7[%c0_11, %c0_12] : memref<8x32xf32, #tpu.memory_space<vmem>>, vector<8x32xf32>
    %c0_13 = arith.constant 0 : index
    %c0_14 = arith.constant 0 : index
    %7 = vector.load %arg8[%c0_13, %c0_14] : memref<8x32xf32, #tpu.memory_space<vmem>>, vector<8x32xf32>
    %c0_15 = arith.constant 0 : index
    %c0_16 = arith.constant 0 : index
    %8 = vector.load %arg9[%c0_15, %c0_16] : memref<8x32xf32, #tpu.memory_space<vmem>>, vector<8x32xf32>
    %9 = arith.mulf %6, %6 : vector<8x32xf32>
    %10 = arith.mulf %7, %7 : vector<8x32xf32>
    %11 = arith.addf %9, %10 : vector<8x32xf32>
    %12 = arith.mulf %4, %4 : vector<8x32xf32>
    %13 = arith.addf %11, %12 : vector<8x32xf32>
    %14 = arith.mulf %8, %8 : vector<8x32xf32>
    %15 = arith.addf %13, %14 : vector<8x32xf32>
    %16 = math.rsqrt %15 : vector<8x32xf32>
    %17 = arith.mulf %6, %16 : vector<8x32xf32>
    %18 = arith.mulf %7, %16 : vector<8x32xf32>
    %19 = arith.mulf %4, %16 : vector<8x32xf32>
    %20 = arith.mulf %8, %16 : vector<8x32xf32>
    %21 = arith.mulf %18, %18 : vector<8x32xf32>
    %22 = arith.mulf %19, %19 : vector<8x32xf32>
    %23 = arith.mulf %20, %20 : vector<8x32xf32>
    %24 = arith.mulf %18, %19 : vector<8x32xf32>
    %25 = arith.mulf %18, %20 : vector<8x32xf32>
    %26 = arith.mulf %19, %20 : vector<8x32xf32>
    %27 = arith.mulf %18, %17 : vector<8x32xf32>
    %28 = arith.mulf %19, %17 : vector<8x32xf32>
    %29 = arith.mulf %20, %17 : vector<8x32xf32>
    %cst = arith.constant 2.000000e+00 : f32
    %30 = vector.broadcast %cst : f32 to vector<8x32xf32>
    %31 = arith.mulf %30, %22 : vector<8x32xf32>
    %cst_17 = arith.constant 1.000000e+00 : f32
    %32 = vector.broadcast %cst_17 : f32 to vector<8x32xf32>
    %33 = arith.subf %32, %31 : vector<8x32xf32>
    %cst_18 = arith.constant 2.000000e+00 : f32
    %34 = vector.broadcast %cst_18 : f32 to vector<8x32xf32>
    %35 = arith.mulf %34, %23 : vector<8x32xf32>
    %36 = arith.subf %33, %35 : vector<8x32xf32>
    %cst_19 = arith.constant 2.000000e+00 : f32
    %37 = vector.broadcast %cst_19 : f32 to vector<8x32xf32>
    %38 = arith.mulf %37, %24 : vector<8x32xf32>
    %cst_20 = arith.constant 2.000000e+00 : f32
    %39 = vector.broadcast %cst_20 : f32 to vector<8x32xf32>
    %40 = arith.mulf %39, %29 : vector<8x32xf32>
    %41 = arith.subf %38, %40 : vector<8x32xf32>
    %cst_21 = arith.constant 2.000000e+00 : f32
    %42 = vector.broadcast %cst_21 : f32 to vector<8x32xf32>
    %43 = arith.mulf %42, %25 : vector<8x32xf32>
    %cst_22 = arith.constant 2.000000e+00 : f32
    %44 = vector.broadcast %cst_22 : f32 to vector<8x32xf32>
    %45 = arith.mulf %44, %28 : vector<8x32xf32>
    %46 = arith.addf %43, %45 : vector<8x32xf32>
    %cst_23 = arith.constant 2.000000e+00 : f32
    %47 = vector.broadcast %cst_23 : f32 to vector<8x32xf32>
    %48 = arith.mulf %47, %24 : vector<8x32xf32>
    %cst_24 = arith.constant 2.000000e+00 : f32
    %49 = vector.broadcast %cst_24 : f32 to vector<8x32xf32>
    %50 = arith.mulf %49, %29 : vector<8x32xf32>
    %51 = arith.addf %48, %50 : vector<8x32xf32>
    %cst_25 = arith.constant 2.000000e+00 : f32
    %52 = vector.broadcast %cst_25 : f32 to vector<8x32xf32>
    %53 = arith.mulf %52, %21 : vector<8x32xf32>
    %cst_26 = arith.constant 1.000000e+00 : f32
    %54 = vector.broadcast %cst_26 : f32 to vector<8x32xf32>
    %55 = arith.subf %54, %53 : vector<8x32xf32>
    %cst_27 = arith.constant 2.000000e+00 : f32
    %56 = vector.broadcast %cst_27 : f32 to vector<8x32xf32>
    %57 = arith.mulf %56, %23 : vector<8x32xf32>
    %58 = arith.subf %55, %57 : vector<8x32xf32>
    %cst_28 = arith.constant 2.000000e+00 : f32
    %59 = vector.broadcast %cst_28 : f32 to vector<8x32xf32>
    %60 = arith.mulf %59, %26 : vector<8x32xf32>
    %cst_29 = arith.constant 2.000000e+00 : f32
    %61 = vector.broadcast %cst_29 : f32 to vector<8x32xf32>
    %62 = arith.mulf %61, %27 : vector<8x32xf32>
    %63 = arith.subf %60, %62 : vector<8x32xf32>
    %cst_30 = arith.constant 2.000000e+00 : f32
    %64 = vector.broadcast %cst_30 : f32 to vector<8x32xf32>
    %65 = arith.mulf %64, %25 : vector<8x32xf32>
    %cst_31 = arith.constant 2.000000e+00 : f32
    %66 = vector.broadcast %cst_31 : f32 to vector<8x32xf32>
    %67 = arith.mulf %66, %28 : vector<8x32xf32>
    %68 = arith.subf %65, %67 : vector<8x32xf32>
    %cst_32 = arith.constant 2.000000e+00 : f32
    %69 = vector.broadcast %cst_32 : f32 to vector<8x32xf32>
    %70 = arith.mulf %69, %26 : vector<8x32xf32>
    %cst_33 = arith.constant 2.000000e+00 : f32
    %71 = vector.broadcast %cst_33 : f32 to vector<8x32xf32>
    %72 = arith.mulf %71, %27 : vector<8x32xf32>
    %73 = arith.addf %70, %72 : vector<8x32xf32>
    %cst_34 = arith.constant 2.000000e+00 : f32
    %74 = vector.broadcast %cst_34 : f32 to vector<8x32xf32>
    %75 = arith.mulf %74, %21 : vector<8x32xf32>
    %cst_35 = arith.constant 1.000000e+00 : f32
    %76 = vector.broadcast %cst_35 : f32 to vector<8x32xf32>
    %77 = arith.subf %76, %75 : vector<8x32xf32>
    %cst_36 = arith.constant 2.000000e+00 : f32
    %78 = vector.broadcast %cst_36 : f32 to vector<8x32xf32>
    %79 = arith.mulf %78, %22 : vector<8x32xf32>
    %80 = arith.subf %77, %79 : vector<8x32xf32>
    %81 = arith.mulf %36, %0 : vector<8x32xf32>
    %82 = arith.mulf %41, %1 : vector<8x32xf32>
    %83 = arith.addf %81, %82 : vector<8x32xf32>
    %84 = arith.mulf %46, %2 : vector<8x32xf32>
    %85 = arith.addf %83, %84 : vector<8x32xf32>
    %86 = arith.subf %85, %3 : vector<8x32xf32>
    %87 = arith.mulf %51, %0 : vector<8x32xf32>
    %88 = arith.mulf %58, %1 : vector<8x32xf32>
    %89 = arith.addf %87, %88 : vector<8x32xf32>
    %90 = arith.mulf %63, %2 : vector<8x32xf32>
    %91 = arith.addf %89, %90 : vector<8x32xf32>
    %92 = arith.subf %91, %4 : vector<8x32xf32>
    %93 = arith.mulf %68, %0 : vector<8x32xf32>
    %94 = arith.mulf %73, %1 : vector<8x32xf32>
    %95 = arith.addf %93, %94 : vector<8x32xf32>
    %96 = arith.mulf %80, %2 : vector<8x32xf32>
    %97 = arith.addf %95, %96 : vector<8x32xf32>
    %98 = arith.subf %97, %5 : vector<8x32xf32>
    %99 = arith.mulf %86, %86 : vector<8x32xf32>
    %100 = arith.mulf %92, %92 : vector<8x32xf32>
    %101 = arith.addf %99, %100 : vector<8x32xf32>
    %102 = arith.mulf %98, %98 : vector<8x32xf32>
    %103 = arith.addf %101, %102 : vector<8x32xf32>
    %104 = math.sqrt %103 : vector<8x32xf32>
    %105 = arith.mulf %36, %3 : vector<8x32xf32>
    %106 = arith.mulf %51, %4 : vector<8x32xf32>
    %107 = arith.addf %105, %106 : vector<8x32xf32>
    %108 = arith.mulf %68, %5 : vector<8x32xf32>
    %109 = arith.addf %107, %108 : vector<8x32xf32>
    %110 = arith.subf %109, %0 : vector<8x32xf32>
    %111 = arith.mulf %41, %3 : vector<8x32xf32>
    %112 = arith.mulf %58, %4 : vector<8x32xf32>
    %113 = arith.addf %111, %112 : vector<8x32xf32>
    %114 = arith.mulf %73, %5 : vector<8x32xf32>
    %115 = arith.addf %113, %114 : vector<8x32xf32>
    %116 = arith.subf %115, %1 : vector<8x32xf32>
    %117 = arith.mulf %46, %3 : vector<8x32xf32>
    %118 = arith.mulf %63, %4 : vector<8x32xf32>
    %119 = arith.addf %117, %118 : vector<8x32xf32>
    %120 = arith.mulf %80, %5 : vector<8x32xf32>
    %121 = arith.addf %119, %120 : vector<8x32xf32>
    %122 = arith.subf %121, %2 : vector<8x32xf32>
    %123 = arith.mulf %110, %110 : vector<8x32xf32>
    %124 = arith.mulf %116, %116 : vector<8x32xf32>
    %125 = arith.addf %123, %124 : vector<8x32xf32>
    %126 = arith.mulf %122, %122 : vector<8x32xf32>
    %127 = arith.addf %125, %126 : vector<8x32xf32>
    %128 = math.sqrt %127 : vector<8x32xf32>
    %129 = arith.addf %104, %128 : vector<8x32xf32>
    %cst_37 = arith.constant dense<0.000000e+00> : vector<8xf32>
    %130 = vector.multi_reduction <add>, %129, %cst_37 [1] : vector<8x32xf32> to vector<8xf32>
    %131 = vector.shape_cast %130 : vector<8xf32> to vector<8x1xf32>
    %cst_38 = arith.constant 1.562500e-02 : f32
    %132 = vector.broadcast %cst_38 : f32 to vector<8x1xf32>
    %133 = arith.mulf %131, %132 : vector<8x1xf32>
    %cst_39 = arith.constant 1.200000e+01 : f32
    %134 = vector.broadcast %cst_39 : f32 to vector<8x1xf32>
    %135 = arith.subf %134, %133 : vector<8x1xf32>
    %c0_40 = arith.constant 0 : index
    %c0_41 = arith.constant 0 : index
    %136 = vector.load %arg10[%c0_40, %c0_41] : memref<8x1xf32, #tpu.memory_space<vmem>>, vector<8x1xf32>
    tpu.vector_store %arg10[%c0_40, %c0_41], %135 {strides = array<i32>} : memref<8x1xf32, #tpu.memory_space<vmem>>, vector<8x1xf32>,
    return
  }
  func.func @transform_0(%arg0: i32) -> (i32, i32) {
    %c0_i32 = arith.constant 0 : i32
    %c0_i32_0 = arith.constant 0 : i32
    return %arg0, %c0_i32 : i32, i32
  }
  func.func @transform_1(%arg0: i32) -> (i32, i32) {
    %c0_i32 = arith.constant 0 : i32
    %c0_i32_0 = arith.constant 0 : i32
    return %arg0, %c0_i32 : i32, i32
  }
  func.func @transform_2(%arg0: i32) -> (i32, i32) {
    %c0_i32 = arith.constant 0 : i32
    %c0_i32_0 = arith.constant 0 : i32
    return %arg0, %c0_i32 : i32, i32
  }
  func.func @transform_3(%arg0: i32) -> (i32, i32) {
    %c0_i32 = arith.constant 0 : i32
    %c0_i32_0 = arith.constant 0 : i32
    return %arg0, %c0_i32 : i32, i32
  }
  func.func @transform_4(%arg0: i32) -> (i32, i32) {
    %c0_i32 = arith.constant 0 : i32
    %c0_i32_0 = arith.constant 0 : i32
    return %arg0, %c0_i32 : i32, i32
  }
  func.func @transform_5(%arg0: i32) -> (i32, i32) {
    %c0_i32 = arith.constant 0 : i32
    %c0_i32_0 = arith.constant 0 : i32
    return %arg0, %c0_i32 : i32, i32
  }
  func.func @transform_6(%arg0: i32) -> (i32, i32) {
    %c0_i32 = arith.constant 0 : i32
    %c0_i32_0 = arith.constant 0 : i32
    return %arg0, %c0_i32 : i32, i32
  }
  func.func @transform_7(%arg0: i32) -> (i32, i32) {
    %c0_i32 = arith.constant 0 : i32
    %c0_i32_0 = arith.constant 0 : i32
    return %arg0, %c0_i32 : i32, i32
  }
  func.func @transform_8(%arg0: i32) -> (i32, i32) {
    %c0_i32 = arith.constant 0 : i32
    %c0_i32_0 = arith.constant 0 : i32
    return %arg0, %c0_i32 : i32, i32
  }
  func.func @transform_9(%arg0: i32) -> (i32, i32) {
    %c0_i32 = arith.constant 0 : i32
    %c0_i32_0 = arith.constant 0 : i32
    return %arg0, %c0_i32 : i32, i32
  }
}

</mosaic_0001>

<llo_original>
// kernel: tpu_custom_call.1
$region0: #{tpu_custom_call.1}
  #allocation0 [shape = 'u32[]', space=smem, size = 0x4, offset = 0x4, fixed_abs, tag = 'smem constant byte address 0x4 - core index']
  #allocation1 [shape = 'u32[144,128]{1,0:T(1,128)}', space=vmem, size = 0x12000, scoped, tag = 'internal scratch']
  %s0 = inlined_call_operand.hbm [shape: f32[8,32], index: 0, kind: input, shape index: {}]
  %s1 = inlined_call_operand.hbm [shape: f32[8,32], index: 1, kind: input, shape index: {}]
  %s2 = inlined_call_operand.hbm [shape: f32[8,32], index: 2, kind: input, shape index: {}]
  %s3 = inlined_call_operand.vmem [shape: f32[8,32], index: 3, kind: input, shape index: {}]
  %s4 = inlined_call_operand.hbm [shape: f32[8,32], index: 4, kind: input, shape index: {}]
  %s5 = inlined_call_operand.vmem [shape: f32[8,32], index: 5, kind: input, shape index: {}]
  %s6 = inlined_call_operand.hbm [shape: f32[8,32], index: 6, kind: input, shape index: {}]
  %s7 = inlined_call_operand.vmem [shape: f32[8,32], index: 7, kind: input, shape index: {}]
  %s8 = inlined_call_operand.hbm [shape: f32[8,32], index: 8, kind: input, shape index: {}]
  %s9 = inlined_call_operand.vmem [shape: f32[8,1], index: 9, kind: output, shape index: {}]
  %s10 = sld [smem:[#allocation0]]
  $region70: #{tpu_custom_call.1} parent=0
    _
  %s12 = ssub.s32 1, %s10
  %s13 = scalar_select 0, %s12, %s10
  $region1: #{tpu_custom_call.1} parent=0
    #allocation2 [shape = 'u8[4096]{0}', space=vmem, size = 0x1000, scoped, tag = 'input window, operand 0, single buffered']
    #allocation3 [shape = 's32[1]{0}', space=sflag, size = 0x4, scoped, tag = 'scoped memory for tpu_custom_call.1']
    #allocation4 [shape = 'u8[4096]{0}', space=vmem, size = 0x1000, scoped, tag = 'input window, operand 1, single buffered']
    #allocation5 [shape = 's32[1]{0}', space=sflag, size = 0x4, scoped, tag = 'scoped memory for tpu_custom_call.1']
    #allocation6 [shape = 'u8[4096]{0}', space=vmem, size = 0x1000, scoped, tag = 'input window, operand 2, single buffered']
    #allocation7 [shape = 'u8[4096]{0}', space=vmem, size = 0x1000, scoped, tag = 'input window, operand 4, single buffered']
    #allocation8 [shape = 's32[1]{0}', space=sflag, size = 0x4, scoped, tag = 'scoped memory for tpu_custom_call.1']
    #allocation9 [shape = 'u8[4096]{0}', space=vmem, size = 0x1000, scoped, tag = 'input window, operand 6, single buffered']
    #allocation10 [shape = 'u8[4096]{0}', space=vmem, size = 0x1000, scoped, tag = 'input window, operand 8, single buffered']
    #allocation11 [shape = 's32[1]{0}', space=sflag, size = 0x4, scoped, tag = 'scoped memory for tpu_custom_call.1']
    %14 = vsyncpa [#allocation3], 0
    %15 = vsyncpa [#allocation5], 0
    %16 = vsyncpa [#allocation8], 0
    %17 = vsyncpa [#allocation11], 0
    // Predicated region
    $region2: #{tpu_custom_call.1} parent=1 // pred_check
      _
    $region3: #{tpu_custom_call.1} parent=1 // pred_check_branch
      %19 = sbr.rel (0) target = $region5
    $region4: #{tpu_custom_call.1} parent=1 // pred_region
      %s21 = ssub.s32 128, 128
      %22 = vsyncadd [#allocation3], %s21
      %s24 = sshll.u32 [#allocation2], 4
      %s25 = int_to_ptr.vmem [resolvable:$true] %s24
      %27 = dma.hbm_to_vmem [thread:$0]  %s0, 128, %s25, [#allocation3]
    $region5: #{tpu_custom_call.1} parent=1 // pred_fallthru
      _
    // Predicated region
    $region6: #{tpu_custom_call.1} parent=1 // pred_check
      _
    $region7: #{tpu_custom_call.1} parent=1 // pred_check_branch
      %29 = sbr.rel (0) target = $region9
    $region8: #{tpu_custom_call.1} parent=1 // pred_region
      %s31 = ssub.s32 128, 128
      %32 = vsyncadd [#allocation5], %s31
      %s34 = sshll.u32 [#allocation4], 4
      %s35 = int_to_ptr.vmem [resolvable:$true] %s34
      %37 = dma.hbm_to_vmem [thread:$0]  %s1, 128, %s35, [#allocation5]
    $region9: #{tpu_custom_call.1} parent=1 // pred_fallthru
      _
    // Predicated region
    $region10: #{tpu_custom_call.1} parent=1 // pred_check
      _
    $region11: #{tpu_custom_call.1} parent=1 // pred_check_branch
      %39 = sbr.rel (0) target = $region13
    $region12: #{tpu_custom_call.1} parent=1 // pred_region
      %s41 = ssub.s32 128, 128
      %42 = vsyncadd [#allocation5], %s41
      %s44 = sshll.u32 [#allocation6], 4
      %s45 = int_to_ptr.vmem [resolvable:$true] %s44
      %47 = dma.hbm_to_vmem [thread:$0]  %s2, 128, %s45, [#allocation5]
    $region13: #{tpu_custom_call.1} parent=1 // pred_fallthru
      _
    // Predicated region
    $region14: #{tpu_custom_call.1} parent=1 // pred_check
      _
    $region15: #{tpu_custom_call.1} parent=1 // pred_check_branch
      %49 = sbr.rel (0) target = $region17
    $region16: #{tpu_custom_call.1} parent=1 // pred_region
      _
    $region17: #{tpu_custom_call.1} parent=1 // pred_fallthru
      _
    // Predicated region
    $region18: #{tpu_custom_call.1} parent=1 // pred_check
      _
    $region19: #{tpu_custom_call.1} parent=1 // pred_check_branch
      %51 = sbr.rel (0) target = $region21
    $region20: #{tpu_custom_call.1} parent=1 // pred_region
      %s53 = ssub.s32 128, 128
      %54 = vsyncadd [#allocation8], %s53
      %s56 = sshll.u32 [#allocation7], 4
      %s57 = int_to_ptr.vmem [resolvable:$true] %s56
      %59 = dma.hbm_to_vmem [thread:$0]  %s4, 128, %s57, [#allocation8]
    $region21: #{tpu_custom_call.1} parent=1 // pred_fallthru
      _
    // Predicated region
    $region22: #{tpu_custom_call.1} parent=1 // pred_check
      _
    $region23: #{tpu_custom_call.1} parent=1 // pred_check_branch
      %61 = sbr.rel (0) target = $region25
    $region24: #{tpu_custom_call.1} parent=1 // pred_region
      _
    $region25: #{tpu_custom_call.1} parent=1 // pred_fallthru
      _
    // Predicated region
    $region26: #{tpu_custom_call.1} parent=1 // pred_check
      _
    $region27: #{tpu_custom_call.1} parent=1 // pred_check_branch
      %63 = sbr.rel (0) target = $region29
    $region28: #{tpu_custom_call.1} parent=1 // pred_region
      %s65 = ssub.s32 128, 128
      %66 = vsyncadd [#allocation8], %s65
      %s68 = sshll.u32 [#allocation9], 4
      %s69 = int_to_ptr.vmem [resolvable:$true] %s68
      %71 = dma.hbm_to_vmem [thread:$0]  %s6, 128, %s69, [#allocation8]
    $region29: #{tpu_custom_call.1} parent=1 // pred_fallthru
      _
    // Predicated region
    $region30: #{tpu_custom_call.1} parent=1 // pred_check
      _
    $region31: #{tpu_custom_call.1} parent=1 // pred_check_branch
      %73 = sbr.rel (0) target = $region33
    $region32: #{tpu_custom_call.1} parent=1 // pred_region
      _
    $region33: #{tpu_custom_call.1} parent=1 // pred_fallthru
      _
    // Predicated region
    $region34: #{tpu_custom_call.1} parent=1 // pred_check
      _
    $region35: #{tpu_custom_call.1} parent=1 // pred_check_branch
      %75 = sbr.rel (0) target = $region37
    $region36: #{tpu_custom_call.1} parent=1 // pred_region
      %s77 = ssub.s32 128, 128
      %78 = vsyncadd [#allocation11], %s77
      %s80 = sshll.u32 [#allocation10], 4
      %s81 = int_to_ptr.vmem [resolvable:$true] %s80
      %83 = dma.hbm_to_vmem [thread:$0]  %s8, 128, %s81, [#allocation11]
    $region37: #{tpu_custom_call.1} parent=1 // pred_fallthru
      _
    // Predicated region
    $region38: #{tpu_custom_call.1} parent=1 // pred_check
      _
    $region39: #{tpu_custom_call.1} parent=1 // pred_check_branch
      %85 = sbr.rel (0) target = $region41
    $region40: #{tpu_custom_call.1} parent=1 // pred_region
      %86 = dma.done [#allocation3], 128
    $region41: #{tpu_custom_call.1} parent=1 // pred_fallthru
      _
    // Predicated region
    $region42: #{tpu_custom_call.1} parent=1 // pred_check
      _
    $region43: #{tpu_custom_call.1} parent=1 // pred_check_branch
      %88 = sbr.rel (0) target = $region45
    $region44: #{tpu_custom_call.1} parent=1 // pred_region
      %89 = dma.done [#allocation5], 128
    $region45: #{tpu_custom_call.1} parent=1 // pred_fallthru
      _
    // Predicated region
    $region46: #{tpu_custom_call.1} parent=1 // pred_check
      _
    $region47: #{tpu_custom_call.1} parent=1 // pred_check_branch
      %91 = sbr.rel (0) target = $region49
    $region48: #{tpu_custom_call.1} parent=1 // pred_region
      %92 = dma.done [#allocation5], 128
    $region49: #{tpu_custom_call.1} parent=1 // pred_fallthru
      _
    // Predicated region
    $region50: #{tpu_custom_call.1} parent=1 // pred_check
      _
    $region51: #{tpu_custom_call.1} parent=1 // pred_check_branch
      %94 = sbr.rel (0) target = $region53
    $region52: #{tpu_custom_call.1} parent=1 // pred_region
      %95 = dma.done [#allocation8], 128
    $region53: #{tpu_custom_call.1} parent=1 // pred_fallthru
      _
    // Predicated region
    $region54: #{tpu_custom_call.1} parent=1 // pred_check
      _
    $region55: #{tpu_custom_call.1} parent=1 // pred_check_branch
      %97 = sbr.rel (0) target = $region57
    $region56: #{tpu_custom_call.1} parent=1 // pred_region
      %98 = dma.done [#allocation8], 128
    $region57: #{tpu_custom_call.1} parent=1 // pred_fallthru
      _
    // Predicated region
    $region58: #{tpu_custom_call.1} parent=1 // pred_check
      _
    $region59: #{tpu_custom_call.1} parent=1 // pred_check_branch
      %100 = sbr.rel (0) target = $region61
    $region60: #{tpu_custom_call.1} parent=1 // pred_region
      %101 = dma.done [#allocation11], 128
    $region61: #{tpu_custom_call.1} parent=1 // pred_fallthru
      _
    %v102 = vld [vmem:[#allocation2] sm:$0xff]
    %v103 = vld [vmem:[#allocation4] sm:$0xff]
    %v104 = vld [vmem:[#allocation6] sm:$0xff]
    %v105 = vld [vmem:[%s3] sm:$0xff]
    %v106 = vld [vmem:[#allocation7] sm:$0xff]
    %v107 = vld [vmem:[%s5] sm:$0xff]
    %v108 = vld [vmem:[#allocation9] sm:$0xff]
    %v109 = vld [vmem:[%s7] sm:$0xff]
    %v110 = vld [vmem:[#allocation10] sm:$0xff]
    %v111 = vmul.f32 %v108, %v108
    %v112 = vmul.f32 %v109, %v109
    %v113 = vadd.f32 %v111, %v112
    %v114 = vmul.f32 %v106, %v106
    %v115 = vadd.f32 %v113, %v114
    %v116 = vmul.f32 %v110, %v110
    %v117 = vadd.f32 %v115, %v116
    %v118 = vrsqrt.pop %v117
    %v119 = vmul.f32 %v108, %v118
    %v120 = vmul.f32 %v109, %v118
    %v121 = vmul.f32 %v106, %v118
    %v122 = vmul.f32 %v110, %v118
    %v123 = vmul.f32 %v120, %v120
    %v124 = vmul.f32 %v121, %v121
    %v125 = vmul.f32 %v122, %v122
    %v126 = vmul.f32 %v120, %v121
    %v127 = vmul.f32 %v120, %v122
    %v128 = vmul.f32 %v121, %v122
    %v129 = vmul.f32 %v120, %v119
    %v130 = vmul.f32 %v121, %v119
    %v131 = vmul.f32 %v122, %v119
    %v132 = vmul.f32 %v124, 2.0
    %v133 = vsub.f32 1.0, %v132
    %v134 = vmul.f32 %v125, 2.0
    %v135 = vsub.f32 %v133, %v134
    %v136 = vmul.f32 %v126, 2.0
    %v137 = vmul.f32 %v131, 2.0
    %v138 = vsub.f32 %v136, %v137
    %v139 = vmul.f32 %v127, 2.0
    %v140 = vmul.f32 %v130, 2.0
    %v141 = vadd.f32 %v139, %v140
    %v142 = vadd.f32 %v136, %v137
    %v143 = vmul.f32 %v123, 2.0
    %v144 = vsub.f32 1.0, %v143
    %v145 = vsub.f32 %v144, %v134
    %v146 = vmul.f32 %v128, 2.0
    %v147 = vmul.f32 %v129, 2.0
    %v148 = vsub.f32 %v146, %v147
    %v149 = vsub.f32 %v139, %v140
    %v150 = vadd.f32 %v146, %v147
    %v151 = vsub.f32 %v144, %v132
    %v152 = vmul.f32 %v135, %v102
    %v153 = vmul.f32 %v138, %v103
    %v154 = vadd.f32 %v152, %v153
    %v155 = vmul.f32 %v141, %v104
    %v156 = vadd.f32 %v154, %v155
    %v157 = vsub.f32 %v156, %v105
    %v158 = vmul.f32 %v142, %v102
    %v159 = vmul.f32 %v145, %v103
    %v160 = vadd.f32 %v158, %v159
    %v161 = vmul.f32 %v148, %v104
    %v162 = vadd.f32 %v160, %v161
    %v163 = vsub.f32 %v162, %v106
    %v164 = vmul.f32 %v149, %v102
    %v165 = vmul.f32 %v150, %v103
    %v166 = vadd.f32 %v164, %v165
    %v167 = vmul.f32 %v151, %v104
    %v168 = vadd.f32 %v166, %v167
    %v169 = vsub.f32 %v168, %v107
    %v170 = vmul.f32 %v157, %v157
    %v171 = vmul.f32 %v163, %v163
    %v172 = vadd.f32 %v170, %v171
    %v173 = vmul.f32 %v169, %v169
    %v174 = vadd.f32 %v172, %v173
    %v175 = vrsqrt.pop %v174
    %v176 = vmul.f32 %v174, %v175
    %vm177 = vcmp.eq.f32.partialorder %v174, inf
    %v178 = vsel %vm177, %v174, %v176
    %vm179 = vcmp.eq.f32.partialorder %v174, 0.0
    %v180 = vand.u32 %v174, 2147483648
    %v181 = vsel %vm179, %v180, %v178
    %v182 = vmul.f32 %v135, %v105
    %v183 = vmul.f32 %v142, %v106
    %v184 = vadd.f32 %v182, %v183
    %v185 = vmul.f32 %v149, %v107
    %v186 = vadd.f32 %v184, %v185
    %v187 = vsub.f32 %v186, %v102
    %v188 = vmul.f32 %v138, %v105
    %v189 = vmul.f32 %v145, %v106
    %v190 = vadd.f32 %v188, %v189
    %v191 = vmul.f32 %v150, %v107
    %v192 = vadd.f32 %v190, %v191
    %v193 = vsub.f32 %v192, %v103
    %v194 = vmul.f32 %v141, %v105
    %v195 = vmul.f32 %v148, %v106
    %v196 = vadd.f32 %v194, %v195
    %v197 = vmul.f32 %v151, %v107
    %v198 = vadd.f32 %v196, %v197
    %v199 = vsub.f32 %v198, %v104
    %v200 = vmul.f32 %v187, %v187
    %v201 = vmul.f32 %v193, %v193
    %v202 = vadd.f32 %v200, %v201
    %v203 = vmul.f32 %v199, %v199
    %v204 = vadd.f32 %v202, %v203
    %v205 = vrsqrt.pop %v204
    %v206 = vmul.f32 %v204, %v205
    %vm207 = vcmp.eq.f32.partialorder %v204, inf
    %v208 = vsel %vm207, %v204, %v206
    %vm209 = vcmp.eq.f32.partialorder %v204, 0.0
    %v210 = vand.u32 %v204, 2147483648
    %v211 = vsel %vm209, %v210, %v208
    %v212 = vadd.f32 %v181, %v211
    %vm213 = vcmask 261120
    %v214 = vsel %vm213, %v212, 0.0
    %215 = vadd.xlane.f32.xlu0 %v214
    %v216 = vpop.xlane.xlu0 %215
    %v217 = vmul.f32 %v216, 0.015625
    %v218 = vsub.f32 12.0, %v217
    %vm219 = vcmask 7168
    %220 = vst.msk [vmem:[%s9] sm:$0xff] %vm219, %v218
    // Predicated region
    $region62: #{tpu_custom_call.1} parent=1 // pred_check
      _
    $region63: #{tpu_custom_call.1} parent=1 // pred_check_branch
      %222 = sbr.rel (0) target = $region65
    $region64: #{tpu_custom_call.1} parent=1 // pred_region
      _
    $region65: #{tpu_custom_call.1} parent=1 // pred_fallthru
      _
    // Predicated region
    $region66: #{tpu_custom_call.1} parent=1 // pred_check
      _
    $region67: #{tpu_custom_call.1} parent=1 // pred_check_branch
      %224 = sbr.rel (0) target = $region69
    $region68: #{tpu_custom_call.1} parent=1 // pred_region
      _
    $region69: #{tpu_custom_call.1} parent=1 // pred_fallthru
      _
    %225 = vsyncpa [#allocation3], 1
    %226 = vsyncpa [#allocation5], 1
    %227 = vsyncpa [#allocation8], 1
    %228 = vsyncpa [#allocation11], 1

</llo_original>
